<compile_context>
chip_gen: v7x
topology: tpu7x:2x2x1
jax: 0.10.0
libtpu: 0.0.40
codegen_flags: <defaults>
</compile_context>

<pallas_src>
import functools

import jax
import jax.numpy as jnp
import numpy as np
from jax.experimental import pallas as pl
from jax.experimental.pallas import tpu as pltpu


def _se_kernel(x_ref,   # (N, C, HWp)  input slab in its native dtype, lanes = HWp
               w_ref,   # (C, 2R)      [fc1.weight.T | fc2.weight], f32
               o_ref,   # (N, C, HWp)  output, same dtype as input
               *, true_hw, r):
    x = x_ref[...].astype(jnp.float32)                       # (N, C, HWp)

    # ---- squeeze: global average pool over the spatial (lane) axis ----
    # padded lanes are zero, so divide the sum by the true HW.
    s = jnp.sum(x, axis=-1, keepdims=True) * (1.0 / float(true_hw))   # (N, C, 1)

    w1t = w_ref[:, :r]                                       # (C, R)
    w2 = w_ref[:, r:]                                        # (C, R)

    # ---- excite: fc1 (C -> R) + ReLU, broadcast-mul + sublane (XLU) reduce ----
    h = jnp.sum(w1t[None, :, :] * s, axis=1, keepdims=True)  # (N, 1, R)
    h = jnp.maximum(h, 0.0)

    # ---- fc2 (R -> C), broadcast-mul + lane (XLU) reduce ----
    z = jnp.sum(w2[None, :, :] * h, axis=2, keepdims=True)   # (N, C, 1)

    # ---- exact sigmoid gate (kernel is memory-bound; divide is hidden) ----
    gate = 1.0 / (1.0 + jnp.exp(-z))                         # (N, C, 1)

    # ---- scale: per-channel gate broadcast across all HW lanes ----
    o_ref[...] = (x * gate).astype(o_ref.dtype)


def se_block(x_nchw, fc1_w, fc2_w):
    """SEBlock forward.  x_nchw: (N, C, H, W); fc1_w: (R, C); fc2_w: (C, R)."""
    N, C, H, W = x_nchw.shape
    HW = H * W
    R = fc1_w.shape[0]
    HWp = ((HW + 127) // 128) * 128                           # lane-dense spatial width

    x = x_nchw.reshape(N, C, HW)                              # free reshape, native dtype
    if HWp != HW:
        x = jnp.pad(x, ((0, 0), (0, 0), (0, HWp - HW)))       # zero-pad spatial lanes

    # Single fused weight operand: [fc1.weight.T | fc2.weight] -> (C, 2R), f32.
    w = jnp.concatenate(
        [jnp.asarray(fc1_w, jnp.float32).T, jnp.asarray(fc2_w, jnp.float32)],
        axis=1)

    # VMEM budget from the actual blocks: double-buffered in + out slabs plus
    # the (lane-padded) weight tile, with headroom; clamped to the chip's cap.
    item = x.dtype.itemsize
    slab_bytes = N * C * HWp * item
    w_bytes = max(C, 8) * 128 * 4
    needed = 2 * (2 * slab_bytes + w_bytes) + (2 << 20)
    try:
        cap = pltpu.get_tpu_info().vmem_capacity_bytes
    except Exception:
        cap = 64 << 20                                        # conservative (v7x)
    vmem_limit = int(min(max(needed, 4 << 20), int(cap * 0.875)))

    kernel = functools.partial(_se_kernel, true_hw=HW, r=R)

    out = pl.pallas_call(
        kernel,
        out_shape=jax.ShapeDtypeStruct((N, C, HWp), x.dtype),
        grid=(1,),                                            # whole batch in one step
        in_specs=[
            pl.BlockSpec((N, C, HWp), lambda i: (0, 0, 0)),
            pl.BlockSpec((C, 2 * R), lambda i: (0, 0)),
        ],
        out_specs=pl.BlockSpec((N, C, HWp), lambda i: (0, 0, 0)),
        compiler_params=pltpu.CompilerParams(
            dimension_semantics=("arbitrary",),
            vmem_limit_bytes=vmem_limit),
    )(x, w)

    return out[:, :, :HW].reshape(N, C, H, W)


# ----------------------------- pure-JAX reference -----------------------------

def ref_forward(x_nchw, fc1_w, fc2_w):
    s = x_nchw.astype(jnp.float32).mean(axis=(2, 3))          # (N, C)
    h = jax.nn.relu(s @ fc1_w.T)                              # (N, R)
    g = jax.nn.sigmoid(h @ fc2_w.T)                           # (N, C)
    return (x_nchw.astype(jnp.float32) * g[:, :, None, None]).astype(x_nchw.dtype)


# ----------------------------- main -----------------------------

if __name__ == "__main__":
    # channels // reduction must be >= 1, so use C=32, reduction=16 (R=2).
    # H=W=14 exercises the non-multiple-of-128 spatial padding path (HW=196 -> 256).
    N, C, H, W = 2, 32, 14, 14
    REDUCTION = 16
    R = C // REDUCTION

    key = jax.random.PRNGKey(0)
    kx, k1, k2 = jax.random.split(key, 3)
    x = jax.random.normal(kx, (N, C, H, W), jnp.float32)          # NCHW, like PyTorch
    fc1_w = 0.2 * jax.random.normal(k1, (R, C), jnp.float32)      # nn.Linear(C, R).weight
    fc2_w = 0.2 * jax.random.normal(k2, (C, R), jnp.float32)      # nn.Linear(R, C).weight

    out = jax.block_until_ready(se_block(x, fc1_w, fc2_w))
    ref = jax.block_until_ready(ref_forward(x, fc1_w, fc2_w))

    np.testing.assert_allclose(np.asarray(out), np.asarray(ref), rtol=1e-5, atol=1e-5)
    print("KERNEL_OK")
</pallas_src>

<mosaic_0001>
module attributes {stable_mosaic.version = 11 : i64} {
  func.func @_se_kernel(%arg0: i32, %arg1: memref<2x32x256xf32, #tpu.memory_space<vmem>>, %arg2: memref<32x4xf32, #tpu.memory_space<vmem>>, %arg3: memref<2x32x256xf32, #tpu.memory_space<vmem>>) attributes {dimension_semantics = [#tpu.dimension_semantics<arbitrary>], iteration_bounds = array<i64: 1>, scalar_prefetch = 0 : i64, scratch_operands = 0 : i64, tpu.core_type = #tpu.core_type<tc>, window_params = [{pipeline_mode = #tpu.pipeline_mode<synchronous>, transform_indices = @transform_0, window_bounds = array<i64: 2, 32, 256>}, {pipeline_mode = #tpu.pipeline_mode<synchronous>, transform_indices = @transform_1, window_bounds = array<i64: 32, 4>}, {pipeline_mode = #tpu.pipeline_mode<synchronous>, transform_indices = @transform_2, window_bounds = array<i64: 2, 32, 256>}]} {
    %c0 = arith.constant 0 : index
    %c0_0 = arith.constant 0 : index
    %c0_1 = arith.constant 0 : index
    %0 = vector.load %arg1[%c0, %c0_0, %c0_1] : memref<2x32x256xf32, #tpu.memory_space<vmem>>, vector<2x32x256xf32>
    %cst = arith.constant dense<0.000000e+00> : vector<2x32xf32>
    %1 = vector.multi_reduction <add>, %0, %cst [2] : vector<2x32x256xf32> to vector<2x32xf32>
    %2 = vector.shape_cast %1 : vector<2x32xf32> to vector<2x32x1xf32>
    %cst_2 = arith.constant 0.00510204071 : f32
    %3 = vector.broadcast %cst_2 : f32 to vector<2x32x1xf32>
    %4 = arith.mulf %2, %3 : vector<2x32x1xf32>
    %c0_3 = arith.constant 0 : index
    %c0_4 = arith.constant 0 : index
    %5 = vector.load %arg2[%c0_3, %c0_4] : memref<32x4xf32, #tpu.memory_space<vmem>>, vector<32x2xf32>
    %c0_5 = arith.constant 0 : index
    %c2 = arith.constant 2 : index
    %6 = vector.load %arg2[%c0_5, %c2] : memref<32x4xf32, #tpu.memory_space<vmem>>, vector<32x2xf32>
    %7 = vector.shape_cast %5 : vector<32x2xf32> to vector<1x32x2xf32>
    %8 = vector.broadcast %7 : vector<1x32x2xf32> to vector<2x32x2xf32>
    %9 = vector.broadcast %4 : vector<2x32x1xf32> to vector<2x32x2xf32>
    %10 = arith.mulf %8, %9 : vector<2x32x2xf32>
    %cst_6 = arith.constant dense<0.000000e+00> : vector<2x2xf32>
    %11 = vector.multi_reduction <add>, %10, %cst_6 [1] : vector<2x32x2xf32> to vector<2x2xf32>
    %12 = vector.shape_cast %11 : vector<2x2xf32> to vector<2x1x2xf32>
    %cst_7 = arith.constant 0.000000e+00 : f32
    %13 = vector.broadcast %cst_7 : f32 to vector<2x1x2xf32>
    %14 = arith.maximumf %12, %13 : vector<2x1x2xf32>
    %15 = vector.shape_cast %6 : vector<32x2xf32> to vector<1x32x2xf32>
    %16 = vector.broadcast %15 : vector<1x32x2xf32> to vector<2x32x2xf32>
    %17 = vector.broadcast %14 : vector<2x1x2xf32> to vector<2x32x2xf32>
    %18 = arith.mulf %16, %17 : vector<2x32x2xf32>
    %cst_8 = arith.constant dense<0.000000e+00> : vector<2x32xf32>
    %19 = vector.multi_reduction <add>, %18, %cst_8 [2] : vector<2x32x2xf32> to vector<2x32xf32>
    %20 = vector.shape_cast %19 : vector<2x32xf32> to vector<2x32x1xf32>
    %cst_9 = arith.constant 0.000000e+00 : f32
    %21 = vector.broadcast %cst_9 : f32 to vector<2x32x1xf32>
    %22 = arith.subf %21, %20 : vector<2x32x1xf32>
    %23 = math.exp %22 : vector<2x32x1xf32>
    %cst_10 = arith.constant 1.000000e+00 : f32
    %24 = vector.broadcast %cst_10 : f32 to vector<2x32x1xf32>
    %25 = arith.addf %24, %23 : vector<2x32x1xf32>
    %cst_11 = arith.constant 1.000000e+00 : f32
    %26 = vector.broadcast %cst_11 : f32 to vector<2x32x1xf32>
    %27 = arith.divf %26, %25 : vector<2x32x1xf32>
    %28 = vector.broadcast %27 : vector<2x32x1xf32> to vector<2x32x256xf32>
    %29 = arith.mulf %0, %28 : vector<2x32x256xf32>
    %c0_12 = arith.constant 0 : index
    %c0_13 = arith.constant 0 : index
    %c0_14 = arith.constant 0 : index
    %30 = vector.load %arg3[%c0_12, %c0_13, %c0_14] : memref<2x32x256xf32, #tpu.memory_space<vmem>>, vector<2x32x256xf32>
    tpu.vector_store %arg3[%c0_12, %c0_13, %c0_14], %29 {strides = array<i32>} : memref<2x32x256xf32, #tpu.memory_space<vmem>>, vector<2x32x256xf32>,
    return
  }
  func.func @transform_0(%arg0: i32) -> (i32, i32, i32) {
    %c0_i32 = arith.constant 0 : i32
    %c0_i32_0 = arith.constant 0 : i32
    %c0_i32_1 = arith.constant 0 : i32
    %c0_i32_2 = arith.constant 0 : i32
    return %c0_i32, %c0_i32_0, %c0_i32_1 : i32, i32, i32
  }
  func.func @transform_1(%arg0: i32) -> (i32, i32) {
    %c0_i32 = arith.constant 0 : i32
    %c0_i32_0 = arith.constant 0 : i32
    %c0_i32_1 = arith.constant 0 : i32
    return %c0_i32, %c0_i32_0 : i32, i32
  }
  func.func @transform_2(%arg0: i32) -> (i32, i32, i32) {
    %c0_i32 = arith.constant 0 : i32
    %c0_i32_0 = arith.constant 0 : i32
    %c0_i32_1 = arith.constant 0 : i32
    %c0_i32_2 = arith.constant 0 : i32
    return %c0_i32, %c0_i32_0, %c0_i32_1 : i32, i32, i32
  }
}

</mosaic_0001>

<llo_original>
// kernel: tpu_custom_call.1
$region0: #{tpu_custom_call.1}
  #allocation0 [shape = 'u32[]', space=smem, size = 0x4, offset = 0x4, fixed_abs, tag = 'smem constant byte address 0x4 - core index']
  #allocation1 [shape = 'u32[144,128]{1,0:T(1,128)}', space=vmem, size = 0x12000, scoped, tag = 'internal scratch']
  %s0 = inlined_call_operand.hbm [shape: f32[2,32,256], index: 0, kind: input, shape index: {}]
  %s1 = inlined_call_operand.vmem [shape: f32[32,4], index: 1, kind: input, shape index: {}]
  %s2 = inlined_call_operand.hbm [shape: f32[2,32,256], index: 2, kind: output, shape index: {}]
  %s3 = sld [smem:[#allocation0]]
  $region22: #{tpu_custom_call.1} parent=0
    _
  %s5 = ssub.s32 1, %s3
  %s6 = scalar_select 0, %s5, %s3
  $region1: #{tpu_custom_call.1} parent=0
    #allocation2 [shape = 'u8[65536]{0}', space=vmem, size = 0x10000, scoped, tag = 'input window, operand 0, single buffered']
    #allocation3 [shape = 's32[1]{0}', space=sflag, size = 0x4, scoped, tag = 'scoped memory for tpu_custom_call.1']
    #allocation4 [shape = 's32[1]{0}', space=sflag, size = 0x4, scoped, tag = 'scoped memory for tpu_custom_call.1']
    #allocation5 [shape = 'u8[65536]{0}', space=vmem, size = 0x10000, scoped, tag = 'output window, operand 0, single buffered']
    %7 = vsyncpa [#allocation3], 0
    %8 = vsyncpa [#allocation4], 0
    // Predicated region
    $region2: #{tpu_custom_call.1} parent=1 // pred_check
      _
    $region3: #{tpu_custom_call.1} parent=1 // pred_check_branch
      %10 = sbr.rel (0) target = $region5
    $region4: #{tpu_custom_call.1} parent=1 // pred_region
      %s12 = ssub.s32 2048, 2048
      %13 = vsyncadd [#allocation3], %s12
      %s14 = sshll.u32 [#allocation2], 4
      %s15 = int_to_ptr.vmem [resolvable:$true] %s14
      %20 = dma.hbm_to_vmem [thread:$0]  %s0, 2048, %s15, [#allocation3], 256, 256, 16
    $region5: #{tpu_custom_call.1} parent=1 // pred_fallthru
      _
    // Predicated region
    $region6: #{tpu_custom_call.1} parent=1 // pred_check
      _
    $region7: #{tpu_custom_call.1} parent=1 // pred_check_branch
      %22 = sbr.rel (0) target = $region9
    $region8: #{tpu_custom_call.1} parent=1 // pred_region
      _
    $region9: #{tpu_custom_call.1} parent=1 // pred_fallthru
      _
    // Predicated region
    $region10: #{tpu_custom_call.1} parent=1 // pred_check
      _
    $region11: #{tpu_custom_call.1} parent=1 // pred_check_branch
      %24 = sbr.rel (0) target = $region13
    $region12: #{tpu_custom_call.1} parent=1 // pred_region
      %25 = dma.done [#allocation3], 2048
    $region13: #{tpu_custom_call.1} parent=1 // pred_fallthru
      _
    %v26 = vld [vmem:[#allocation2] sm:$0xff]
    %v27 = vld [vmem:[#allocation2 + $0x8] sm:$0xff]
    %v28 = vld [vmem:[#allocation2 + $0x10] sm:$0xff]
    %v29 = vld [vmem:[#allocation2 + $0x18] sm:$0xff]
    %v30 = vld [vmem:[#allocation2 + $0x20] sm:$0xff]
    %v31 = vld [vmem:[#allocation2 + $0x28] sm:$0xff]
    %v32 = vld [vmem:[#allocation2 + $0x30] sm:$0xff]
    %v33 = vld [vmem:[#allocation2 + $0x38] sm:$0xff]
    %v34 = vld [vmem:[#allocation2 + $0x40] sm:$0xff]
    %v35 = vld [vmem:[#allocation2 + $0x48] sm:$0xff]
    %v36 = vld [vmem:[#allocation2 + $0x50] sm:$0xff]
    %v37 = vld [vmem:[#allocation2 + $0x58] sm:$0xff]
    %v38 = vld [vmem:[#allocation2 + $0x60] sm:$0xff]
    %v39 = vld [vmem:[#allocation2 + $0x68] sm:$0xff]
    %v40 = vld [vmem:[#allocation2 + $0x70] sm:$0xff]
    %v41 = vld [vmem:[#allocation2 + $0x78] sm:$0xff]
    %v42 = vadd.f32 %v26, %v27
    %43 = vadd.xlane.f32.xlu0 %v42
    %v44 = vpop.xlane.xlu0 %43
    %v45 = vadd.f32 %v28, %v29
    %46 = vadd.xlane.f32.xlu0 %v45
    %v47 = vpop.xlane.xlu0 %46
    %v48 = vadd.f32 %v30, %v31
    %49 = vadd.xlane.f32.xlu0 %v48
    %v50 = vpop.xlane.xlu0 %49
    %v51 = vadd.f32 %v32, %v33
    %52 = vadd.xlane.f32.xlu0 %v51
    %v53 = vpop.xlane.xlu0 %52
    %v54 = vadd.f32 %v34, %v35
    %55 = vadd.xlane.f32.xlu0 %v54
    %v56 = vpop.xlane.xlu0 %55
    %v57 = vadd.f32 %v36, %v37
    %58 = vadd.xlane.f32.xlu0 %v57
    %v59 = vpop.xlane.xlu0 %58
    %v60 = vadd.f32 %v38, %v39
    %61 = vadd.xlane.f32.xlu0 %v60
    %v62 = vpop.xlane.xlu0 %61
    %v63 = vadd.f32 %v40, %v41
    %64 = vadd.xlane.f32.xlu0 %v63
    %v65 = vpop.xlane.xlu0 %64
    %v66 = vmul.f32 %v44, 0.0051020407
    %v67 = vmul.f32 %v47, 0.0051020407
    %v68 = vmul.f32 %v50, 0.0051020407
    %v69 = vmul.f32 %v53, 0.0051020407
    %v70 = vmul.f32 %v56, 0.0051020407
    %v71 = vmul.f32 %v59, 0.0051020407
    %v72 = vmul.f32 %v62, 0.0051020407
    %v73 = vmul.f32 %v65, 0.0051020407
    %v74 = vld [vmem:[%s1] sm:$0xff]
    %v75 = vld [vmem:[%s1 + $0x8] sm:$0xff]
    %v76 = vld [vmem:[%s1 + $0x10] sm:$0xff]
    %v77 = vld [vmem:[%s1 + $0x18] sm:$0xff]
    %v78 = vmul.f32 %v74, %v66
    %v79 = vmul.f32 %v75, %v67
    %v80 = vmul.f32 %v76, %v68
    %v81 = vmul.f32 %v77, %v69
    %v82 = vmul.f32 %v74, %v70
    %v83 = vmul.f32 %v75, %v71
    %v84 = vmul.f32 %v76, %v72
    %v85 = vmul.f32 %v77, %v73
    %vm86 = vcmask 15360
    %v87 = vsel %vm86, %v78, 0.0
    %v88 = vsel %vm86, %v79, 0.0
    %v89 = vadd.f32 %v87, %v88
    %v90 = vsel %vm86, %v80, 0.0
    %v91 = vadd.f32 %v89, %v90
    %v92 = vsel %vm86, %v81, 0.0
    %v93 = vadd.f32 %v91, %v92
    %v94 = vrot.slane %v93, 4
    %v95 = vadd.f32 %v93, %v94
    %v96 = vrot.slane %v95, 2
    %v97 = vadd.f32 %v95, %v96
    %v98 = vrot.slane %v97, 1
    %v99 = vadd.f32 %v97, %v98
    %v100 = vsel %vm86, %v82, 0.0
    %v101 = vsel %vm86, %v83, 0.0
    %v102 = vadd.f32 %v100, %v101
    %v103 = vsel %vm86, %v84, 0.0
    %v104 = vadd.f32 %v102, %v103
    %v105 = vsel %vm86, %v85, 0.0
    %v106 = vadd.f32 %v104, %v105
    %v107 = vrot.slane %v106, 4
    %v108 = vadd.f32 %v106, %v107
    %v109 = vrot.slane %v108, 2
    %v110 = vadd.f32 %v108, %v109
    %v111 = vrot.slane %v110, 1
    %v112 = vadd.f32 %v110, %v111
    %v113 = vmax.f32 %v99, 0.0
    %v114 = vmax.f32 %v112, 0.0
    %117 = vrot.lane.b32.xlu0 %v113, 2
    %v118 = vpop.permute.xlu0 %117
    %119 = vrot.lane.b32.xlu0 %v114, 2
    %v120 = vpop.permute.xlu0 %119
    %v123 = vmul.f32 %v74, %v118
    %v124 = vmul.f32 %v75, %v118
    %v125 = vmul.f32 %v76, %v118
    %v126 = vmul.f32 %v77, %v118
    %v127 = vmul.f32 %v74, %v120
    %v128 = vmul.f32 %v75, %v120
    %v129 = vmul.f32 %v76, %v120
    %v130 = vmul.f32 %v77, %v120
    %139 = vrot.lane.b32.xlu0 %v123, 126
    %v140 = vpop.permute.xlu0 %139
    %141 = vrot.lane.b32.xlu0 %v124, 126
    %v142 = vpop.permute.xlu0 %141
    %143 = vrot.lane.b32.xlu0 %v125, 126
    %v144 = vpop.permute.xlu0 %143
    %145 = vrot.lane.b32.xlu0 %v126, 126
    %v146 = vpop.permute.xlu0 %145
    %147 = vrot.lane.b32.xlu0 %v127, 126
    %v148 = vpop.permute.xlu0 %147
    %149 = vrot.lane.b32.xlu0 %v128, 126
    %v150 = vpop.permute.xlu0 %149
    %151 = vrot.lane.b32.xlu0 %v129, 126
    %v152 = vpop.permute.xlu0 %151
    %153 = vrot.lane.b32.xlu0 %v130, 126
    %v154 = vpop.permute.xlu0 %153
    %v163 = vsel %vm86, %v140, 0.0
    %164 = vadd.xlane.f32.xlu0 %v163
    %v165 = vpop.xlane.xlu0 %164
    %v166 = vsel %vm86, %v142, 0.0
    %167 = vadd.xlane.f32.xlu0 %v166
    %v168 = vpop.xlane.xlu0 %167
    %v169 = vsel %vm86, %v144, 0.0
    %170 = vadd.xlane.f32.xlu0 %v169
    %v171 = vpop.xlane.xlu0 %170
    %v172 = vsel %vm86, %v146, 0.0
    %173 = vadd.xlane.f32.xlu0 %v172
    %v174 = vpop.xlane.xlu0 %173
    %v175 = vsel %vm86, %v148, 0.0
    %176 = vadd.xlane.f32.xlu0 %v175
    %v177 = vpop.xlane.xlu0 %176
    %v178 = vsel %vm86, %v150, 0.0
    %179 = vadd.xlane.f32.xlu0 %v178
    %v180 = vpop.xlane.xlu0 %179
    %v181 = vsel %vm86, %v152, 0.0
    %182 = vadd.xlane.f32.xlu0 %v181
    %v183 = vpop.xlane.xlu0 %182
    %v184 = vsel %vm86, %v154, 0.0
    %185 = vadd.xlane.f32.xlu0 %v184
    %v186 = vpop.xlane.xlu0 %185
    %v187 = vsub.f32 0.0, %v165
    %v188 = vsub.f32 0.0, %v168
    %v189 = vsub.f32 0.0, %v171
    %v190 = vsub.f32 0.0, %v174
    %v191 = vsub.f32 0.0, %v177
    %v192 = vsub.f32 0.0, %v180
    %v193 = vsub.f32 0.0, %v183
    %v194 = vsub.f32 0.0, %v186
    %v195 = vmul.f32 %v187, 1.442695
    %v196 = vpow.pop %v195
    %v197 = vmul.f32 %v188, 1.442695
    %v198 = vpow.pop %v197
    %v199 = vmul.f32 %v189, 1.442695
    %v200 = vpow.pop %v199
    %v201 = vmul.f32 %v190, 1.442695
    %v202 = vpow.pop %v201
    %v203 = vmul.f32 %v191, 1.442695
    %v204 = vpow.pop %v203
    %v205 = vmul.f32 %v192, 1.442695
    %v206 = vpow.pop %v205
    %v207 = vmul.f32 %v193, 1.442695
    %v208 = vpow.pop %v207
    %v209 = vmul.f32 %v194, 1.442695
    %v210 = vpow.pop %v209
    %v211 = vadd.f32 %v196, 1.0
    %v212 = vadd.f32 %v198, 1.0
    %v213 = vadd.f32 %v200, 1.0
    %v214 = vadd.f32 %v202, 1.0
    %v215 = vadd.f32 %v204, 1.0
    %v216 = vadd.f32 %v206, 1.0
    %v217 = vadd.f32 %v208, 1.0
    %v218 = vadd.f32 %v210, 1.0
    %v219 = vrcp.pop %v211
    %v220 = vmul.f32 1.0, %v219
    %v221 = vrcp.pop %v212
    %v222 = vmul.f32 1.0, %v221
    %v223 = vrcp.pop %v213
    %v224 = vmul.f32 1.0, %v223
    %v225 = vrcp.pop %v214
    %v226 = vmul.f32 1.0, %v225
    %v227 = vrcp.pop %v215
    %v228 = vmul.f32 1.0, %v227
    %v229 = vrcp.pop %v216
    %v230 = vmul.f32 1.0, %v229
    %v231 = vrcp.pop %v217
    %v232 = vmul.f32 1.0, %v231
    %v233 = vrcp.pop %v218
    %v234 = vmul.f32 1.0, %v233
    %v235 = vmul.f32 %v26, %v220
    %v236 = vmul.f32 %v27, %v220
    %v237 = vmul.f32 %v28, %v222
    %v238 = vmul.f32 %v29, %v222
    %v239 = vmul.f32 %v30, %v224
    %v240 = vmul.f32 %v31, %v224
    %v241 = vmul.f32 %v32, %v226
    %v242 = vmul.f32 %v33, %v226
    %v243 = vmul.f32 %v34, %v228
    %v244 = vmul.f32 %v35, %v228
    %v245 = vmul.f32 %v36, %v230
    %v246 = vmul.f32 %v37, %v230
    %v247 = vmul.f32 %v38, %v232
    %v248 = vmul.f32 %v39, %v232
    %v249 = vmul.f32 %v40, %v234
    %v250 = vmul.f32 %v41, %v234
    %251 = vst [vmem:[#allocation5] sm:$0xff] %v235
    %252 = vst [vmem:[#allocation5 + $0x8] sm:$0xff] %v236
    %253 = vst [vmem:[#allocation5 + $0x10] sm:$0xff] %v237
    %254 = vst [vmem:[#allocation5 + $0x18] sm:$0xff] %v238
    %255 = vst [vmem:[#allocation5 + $0x20] sm:$0xff] %v239
    %256 = vst [vmem:[#allocation5 + $0x28] sm:$0xff] %v240
    %257 = vst [vmem:[#allocation5 + $0x30] sm:$0xff] %v241
    %258 = vst [vmem:[#allocation5 + $0x38] sm:$0xff] %v242
    %259 = vst [vmem:[#allocation5 + $0x40] sm:$0xff] %v243
    %260 = vst [vmem:[#allocation5 + $0x48] sm:$0xff] %v244
    %261 = vst [vmem:[#allocation5 + $0x50] sm:$0xff] %v245
    %262 = vst [vmem:[#allocation5 + $0x58] sm:$0xff] %v246
    %263 = vst [vmem:[#allocation5 + $0x60] sm:$0xff] %v247
    %264 = vst [vmem:[#allocation5 + $0x68] sm:$0xff] %v248
    %265 = vst [vmem:[#allocation5 + $0x70] sm:$0xff] %v249
    %266 = vst [vmem:[#allocation5 + $0x78] sm:$0xff] %v250
    // Predicated region
    $region14: #{tpu_custom_call.1} parent=1 // pred_check
      _
    $region15: #{tpu_custom_call.1} parent=1 // pred_check_branch
      %268 = sbr.rel (0) target = $region17
    $region16: #{tpu_custom_call.1} parent=1 // pred_region
      %s270 = ssub.s32 2048, 2048
      %271 = vsyncadd [#allocation4], %s270
      %s272 = sshll.u32 [#allocation5], 4
      %s273 = int_to_ptr.vmem [resolvable:$true] %s272
      %278 = dma.vmem_to_hbm [thread:$0]  %s273, 2048, %s2, [#allocation4], 256, 256, 16
    $region17: #{tpu_custom_call.1} parent=1 // pred_fallthru
      _
    // Predicated region
    $region18: #{tpu_custom_call.1} parent=1 // pred_check
      _
    $region19: #{tpu_custom_call.1} parent=1 // pred_check_branch
      %280 = sbr.rel (0) target = $region21
    $region20: #{tpu_custom_call.1} parent=1 // pred_region
      %281 = dma.done [#allocation4], 2048
    $region21: #{tpu_custom_call.1} parent=1 // pred_fallthru
      _
    %282 = vsyncpa [#allocation3], 1
    %283 = vsyncpa [#allocation4], 1

</llo_original>
